<compile_context>
chip_gen: v7x
topology: tpu7x:2x2x1
jax: 0.10.0
libtpu: 0.0.40
codegen_flags: <defaults>
</compile_context>

<pallas_src>
import functools

import jax
import jax.numpy as jnp
from jax.experimental import pallas as pl
from jax.experimental.pallas import tpu as pltpu


def _multitask_loss_kernel(logits_ref, labels_ref, hx_ref, hy_ref, sp_ref, st_ref,
                           out_ref, acc_ref, *, B):
    """One batch tile: rows [tile*bt, (tile+1)*bt) of the batch (batch on sublanes)."""
    c = pl.program_id(0)          # split (TensorCore partial) index
    i = pl.program_id(1)          # step within this split (reduction axis)
    ni = pl.num_programs(1)
    t = c * ni + i                # UNCLAMPED global tile id (may exceed the real
                                  # tile count; such tiles mask to zero below)

    x = logits_ref[...].astype(jnp.float32)       # (bt, C)
    lab = labels_ref[...]                         # (bt, 1) int32 (no f32 round-trip)
    hx = hx_ref[...].astype(jnp.float32)          # (bt, 1)
    hy = hy_ref[...].astype(jnp.float32)          # (bt, 1)
    sp = sp_ref[...].astype(jnp.float32)          # (bt, K)
    st = st_ref[...].astype(jnp.float32)          # (bt, K)

    bt, C = x.shape
    K = sp.shape[1]

    # Valid-row mask.  Rows past B (partial final block, or duplicate tiles produced
    # by clamping in the index_map) contribute exactly 0; jnp.where also neutralizes
    # any NaN/Inf garbage read from the out-of-bounds padding region.
    row = t * bt + jax.lax.broadcasted_iota(jnp.int32, (bt, 1), 0)
    valid = row < B                               # (bt, 1) bool

    # ----- CrossEntropy per sample: logsumexp(x) - x[label] -----
    m = jnp.max(x, axis=1, keepdims=True)                                 # (bt, 1)
    lse = m + jnp.log(jnp.sum(jnp.exp(x - m), axis=1, keepdims=True))     # (bt, 1)
    cls_idx = jax.lax.broadcasted_iota(jnp.int32, (bt, C), 1)
    picked = jnp.sum(jnp.where(cls_idx == lab, x, 0.0),
                     axis=1, keepdims=True)                               # (bt, 1)
    ce = lse - picked

    # ----- BCE-with-logits per sample (numerically stable) -----
    # log(1+exp(-|x|)); log1p would be marginally tighter but the difference
    # (<1.5e-7) is far below the 1e-5 tolerance and the EUP cost is identical.
    bce = jnp.maximum(hx, 0.0) - hx * hy + jnp.log(1.0 + jnp.exp(-jnp.abs(hx)))

    # ----- MSE per sample, summed over the K scales -----
    d = sp - st
    mse = jnp.sum(d * d, axis=1, keepdims=True)                           # (bt, 1)

    # ----- combine with true-batch divisors, mask, accumulate (VPU only) -----
    inv_b = 1.0 / B          # CE mean over B samples; BCE mean over B elements
    inv_bk = 1.0 / (B * K)   # MSE mean over B*K elements
    contrib = jnp.where(valid, (ce + bce) * inv_b + mse * inv_bk, 0.0)    # (bt, 1)

    @pl.when(i == 0)
    def _():
        acc_ref[...] = jnp.zeros_like(acc_ref)

    acc_ref[...] += contrib

    # Single cross-sublane reduce + single output store per split.
    @pl.when(i == ni - 1)
    def _():
        out_ref[...] = jnp.broadcast_to(jnp.sum(acc_ref[...]), (1, 1, 128))


def multitask_loss(sent_logits, sent_labels, humor_logits, humor_labels,
                   scales_pred, scales_tgt, *, max_rows=1024):
    """Pallas equivalent of MultitaskLoss.forward(outputs, labels).

    max_rows: batch-tile height in rows (must be a multiple of 8).  Larger tiles
    amortize the per-grid-step overhead; keep 2 * 6 * max_rows * 128 * 4 bytes under
    the scoped VMEM limit (set vmem_limit_bytes if you go past ~2048 on v5e).
    """
    B, C = sent_logits.shape
    K = scales_pred.shape[-1]
    assert max_rows % 8 == 0

    bt = min(max_rows, 8 * pl.cdiv(B, 8))     # rows per tile, multiple of 8
    nb = pl.cdiv(B, bt)                       # number of batch tiles
    nsplit = 2 if nb >= 2 else 1              # per-TensorCore partials (v7x); no-op on 1-TC chips
    ni = pl.cdiv(nb, nsplit)                  # tiles per split

    # Free layout-compatible reshapes only (no transpose / pad / concatenate passes).
    labels2 = sent_labels.reshape(B, 1)
    hx2 = humor_logits.reshape(B, 1)
    hy2 = humor_labels.reshape(B, 1)

    def row_map(c, i):
        # Clamp so a split's trailing (unused) tile never indexes past the array;
        # the kernel masks such duplicate tiles to zero via the UNCLAMPED tile id.
        return (jnp.minimum(c * ni + i, nb - 1), 0)

    kernel = functools.partial(_multitask_loss_kernel, B=B)

    out = pl.pallas_call(
        kernel,
        out_shape=jax.ShapeDtypeStruct((nsplit, 1, 128), jnp.float32),
        grid=(nsplit, ni),
        in_specs=[
            pl.BlockSpec((bt, C), row_map),   # sentiment logits (native dtype)
            pl.BlockSpec((bt, 1), row_map),   # sentiment labels (int32)
            pl.BlockSpec((bt, 1), row_map),   # humor logits
            pl.BlockSpec((bt, 1), row_map),   # humor labels (int)
            pl.BlockSpec((bt, K), row_map),   # scales pred
            pl.BlockSpec((bt, K), row_map),   # scales target
        ],
        # One lane-dense output block per split; written once (on the last step).
        out_specs=pl.BlockSpec((1, 1, 128), lambda c, i: (c, 0, 0)),
        scratch_shapes=[pltpu.VMEM((bt, 1), jnp.float32)],
        compiler_params=pltpu.CompilerParams(
            dimension_semantics=("parallel", "arbitrary")),
    )(sent_logits, labels2, hx2, hy2, scales_pred, scales_tgt)

    # Add the per-split (per-core) partials; trivial 2-element reduce.
    return jnp.sum(out[:, 0, 0])


def _reference_loss(sent_logits, sent_labels, humor_logits, humor_labels,
                    scales_pred, scales_tgt):
    # Pure-JAX reference mirroring torch semantics (all losses 'mean' reduction).
    logits = sent_logits.astype(jnp.float32)
    lse = jax.nn.logsumexp(logits, axis=1)
    picked = jnp.take_along_axis(logits, sent_labels[:, None], axis=1)[:, 0]
    ce = jnp.mean(lse - picked)
    x = humor_logits.astype(jnp.float32)
    y = humor_labels.astype(jnp.float32)
    bce = jnp.mean(jnp.maximum(x, 0.0) - x * y + jnp.log1p(jnp.exp(-jnp.abs(x))))
    mse = jnp.mean((scales_pred.astype(jnp.float32)
                    - scales_tgt.astype(jnp.float32)) ** 2)
    return ce + bce + mse


def _make_inputs(key, B, C, K):
    k1, k2, k3, k4, k5, k6 = jax.random.split(key, 6)
    sent_logits = jax.random.normal(k1, (B, C), dtype=jnp.float32)
    humor_logits = jax.random.normal(k2, (B,), dtype=jnp.float32)
    scales_pred = jax.random.normal(k3, (B, K), dtype=jnp.float32)
    sent_labels = jax.random.randint(k4, (B,), 0, C, dtype=jnp.int32)
    humor_labels = jax.random.randint(k5, (B,), 0, 2, dtype=jnp.int32)
    scales_tgt = jax.random.normal(k6, (B, K), dtype=jnp.float32)
    return (sent_logits, sent_labels, humor_logits, humor_labels,
            scales_pred, scales_tgt)


if __name__ == "__main__":
    key = jax.random.PRNGKey(0)
    k_a, k_b = jax.random.split(key)

    # Case 1: small batch -> single grid point, single split.
    args = _make_inputs(k_a, B=8, C=4, K=4)
    loss = jax.block_until_ready(multitask_loss(*args))
    ref = _reference_loss(*args)
    assert jnp.allclose(loss, ref, rtol=1e-5, atol=1e-5), (loss, ref)

    # Case 2: 4 batch tiles -> grid (2, 2): two per-split partials, multi-step
    # accumulation, and a masked partial final tile (200 not a multiple of 64).
    args = _make_inputs(k_b, B=200, C=5, K=3)
    loss = jax.block_until_ready(multitask_loss(*args, max_rows=64))
    ref = _reference_loss(*args)
    assert jnp.allclose(loss, ref, rtol=1e-5, atol=1e-5), (loss, ref)

    # Case 3: 3 batch tiles split over 2 -> grid (2, 2) with one clamped duplicate
    # tile that must be fully masked out (exercises the clamp + unclamped-mask path).
    loss = jax.block_until_ready(multitask_loss(*args, max_rows=72))
    assert jnp.allclose(loss, ref, rtol=1e-5, atol=1e-5), (loss, ref)

    print("KERNEL_OK")
</pallas_src>

<mosaic_0001>
module attributes {stable_mosaic.version = 11 : i64} {
  func.func @_multitask_loss_kernel(%arg0: i32, %arg1: i32, %arg2: memref<8x4xf32, #tpu.memory_space<vmem>>, %arg3: memref<8x1xi32, #tpu.memory_space<vmem>>, %arg4: memref<8x1xf32, #tpu.memory_space<vmem>>, %arg5: memref<8x1xi32, #tpu.memory_space<vmem>>, %arg6: memref<8x4xf32, #tpu.memory_space<vmem>>, %arg7: memref<8x4xf32, #tpu.memory_space<vmem>>, %arg8: memref<1x1x128xf32, #tpu.memory_space<vmem>>, %arg9: memref<8x1xf32, #tpu.memory_space<vmem>>) attributes {dimension_semantics = [#tpu.dimension_semantics<parallel>, #tpu.dimension_semantics<arbitrary>], iteration_bounds = array<i64: 1, 1>, scalar_prefetch = 0 : i64, scratch_operands = 1 : i64, tpu.core_type = #tpu.core_type<tc>, window_params = [{transform_indices = @transform_0, window_bounds = array<i64: 8, 4>}, {transform_indices = @transform_1, window_bounds = array<i64: 8, 1>}, {transform_indices = @transform_2, window_bounds = array<i64: 8, 1>}, {transform_indices = @transform_3, window_bounds = array<i64: 8, 1>}, {transform_indices = @transform_4, window_bounds = array<i64: 8, 4>}, {transform_indices = @transform_5, window_bounds = array<i64: 8, 4>}, {transform_indices = @transform_6, window_bounds = array<i64: 1, 1, 128>}]} {
    %c1_i32 = arith.constant 1 : i32
    %0 = arith.muli %arg0, %c1_i32 : i32
    %1 = arith.addi %0, %arg1 : i32
    %c0 = arith.constant 0 : index
    %c0_0 = arith.constant 0 : index
    %2 = vector.load %arg2[%c0, %c0_0] : memref<8x4xf32, #tpu.memory_space<vmem>>, vector<8x4xf32>
    %c0_1 = arith.constant 0 : index
    %c0_2 = arith.constant 0 : index
    %3 = vector.load %arg3[%c0_1, %c0_2] : memref<8x1xi32, #tpu.memory_space<vmem>>, vector<8x1xi32>
    %c0_3 = arith.constant 0 : index
    %c0_4 = arith.constant 0 : index
    %4 = vector.load %arg4[%c0_3, %c0_4] : memref<8x1xf32, #tpu.memory_space<vmem>>, vector<8x1xf32>
    %c0_5 = arith.constant 0 : index
    %c0_6 = arith.constant 0 : index
    %5 = vector.load %arg5[%c0_5, %c0_6] : memref<8x1xi32, #tpu.memory_space<vmem>>, vector<8x1xi32>
    %6 = arith.sitofp %5 : vector<8x1xi32> to vector<8x1xf32>
    %c0_7 = arith.constant 0 : index
    %c0_8 = arith.constant 0 : index
    %7 = vector.load %arg6[%c0_7, %c0_8] : memref<8x4xf32, #tpu.memory_space<vmem>>, vector<8x4xf32>
    %c0_9 = arith.constant 0 : index
    %c0_10 = arith.constant 0 : index
    %8 = vector.load %arg7[%c0_9, %c0_10] : memref<8x4xf32, #tpu.memory_space<vmem>>, vector<8x4xf32>
    %c8_i32 = arith.constant 8 : i32
    %9 = arith.muli %1, %c8_i32 : i32
    %10 = tpu.iota {dimensions = array<i32: 0>} : vector<8x1xi32>
    %11 = vector.broadcast %9 : i32 to vector<8x1xi32>
    %12 = arith.addi %11, %10 : vector<8x1xi32>
    %c8_i32_11 = arith.constant 8 : i32
    %13 = vector.broadcast %c8_i32_11 : i32 to vector<8x1xi32>
    %14 = arith.cmpi slt, %12, %13 : vector<8x1xi32>
    %cst = arith.constant dense<0xFF800000> : vector<8xf32>
    %15 = vector.multi_reduction <maximumf>, %2, %cst [1] : vector<8x4xf32> to vector<8xf32>
    %16 = vector.shape_cast %15 : vector<8xf32> to vector<8x1xf32>
    %17 = vector.broadcast %16 : vector<8x1xf32> to vector<8x4xf32>
    %18 = arith.subf %2, %17 : vector<8x4xf32>
    %19 = math.exp %18 : vector<8x4xf32>
    %cst_12 = arith.constant dense<0.000000e+00> : vector<8xf32>
    %20 = vector.multi_reduction <add>, %19, %cst_12 [1] : vector<8x4xf32> to vector<8xf32>
    %21 = vector.shape_cast %20 : vector<8xf32> to vector<8x1xf32>
    %22 = math.log %21 : vector<8x1xf32>
    %23 = arith.addf %16, %22 : vector<8x1xf32>
    %24 = tpu.iota {dimensions = array<i32: 1>} : vector<8x4xi32>
    %25 = vector.broadcast %3 : vector<8x1xi32> to vector<8x4xi32>
    %26 = arith.cmpi eq, %24, %25 : vector<8x4xi32>
    %cst_13 = arith.constant 0.000000e+00 : f32
    %27 = vector.broadcast %cst_13 : f32 to vector<8x4xf32>
    %28 = arith.select %26, %2, %27 : vector<8x4xi1>, vector<8x4xf32>
    %cst_14 = arith.constant dense<0.000000e+00> : vector<8xf32>
    %29 = vector.multi_reduction <add>, %28, %cst_14 [1] : vector<8x4xf32> to vector<8xf32>
    %30 = vector.shape_cast %29 : vector<8xf32> to vector<8x1xf32>
    %31 = arith.subf %23, %30 : vector<8x1xf32>
    %cst_15 = arith.constant 0.000000e+00 : f32
    %32 = vector.broadcast %cst_15 : f32 to vector<8x1xf32>
    %33 = arith.maximumf %4, %32 : vector<8x1xf32>
    %34 = arith.mulf %4, %6 : vector<8x1xf32>
    %35 = arith.subf %33, %34 : vector<8x1xf32>
    %36 = math.absf %4 : vector<8x1xf32>
    %cst_16 = arith.constant 0.000000e+00 : f32
    %37 = vector.broadcast %cst_16 : f32 to vector<8x1xf32>
    %38 = arith.subf %37, %36 : vector<8x1xf32>
    %39 = math.exp %38 : vector<8x1xf32>
    %cst_17 = arith.constant 1.000000e+00 : f32
    %40 = vector.broadcast %cst_17 : f32 to vector<8x1xf32>
    %41 = arith.addf %40, %39 : vector<8x1xf32>
    %42 = math.log %41 : vector<8x1xf32>
    %43 = arith.addf %35, %42 : vector<8x1xf32>
    %44 = arith.subf %7, %8 : vector<8x4xf32>
    %45 = arith.mulf %44, %44 : vector<8x4xf32>
    %cst_18 = arith.constant dense<0.000000e+00> : vector<8xf32>
    %46 = vector.multi_reduction <add>, %45, %cst_18 [1] : vector<8x4xf32> to vector<8xf32>
    %47 = vector.shape_cast %46 : vector<8xf32> to vector<8x1xf32>
    %48 = arith.addf %31, %43 : vector<8x1xf32>
    %cst_19 = arith.constant 1.250000e-01 : f32
    %49 = vector.broadcast %cst_19 : f32 to vector<8x1xf32>
    %50 = arith.mulf %48, %49 : vector<8x1xf32>
    %cst_20 = arith.constant 3.125000e-02 : f32
    %51 = vector.broadcast %cst_20 : f32 to vector<8x1xf32>
    %52 = arith.mulf %47, %51 : vector<8x1xf32>
    %53 = arith.addf %50, %52 : vector<8x1xf32>
    %cst_21 = arith.constant 0.000000e+00 : f32
    %54 = vector.broadcast %cst_21 : f32 to vector<8x1xf32>
    %55 = arith.select %14, %53, %54 : vector<8x1xi1>, vector<8x1xf32>
    %c0_i32 = arith.constant 0 : i32
    %56 = arith.cmpi eq, %arg1, %c0_i32 : i32
    %57 = arith.extui %56 : i1 to i32
    %c0_i32_22 = arith.constant 0 : i32
    %58 = arith.cmpi ne, %57, %c0_i32_22 : i32
    scf.if %58 {
      %cst_29 = arith.constant 0.000000e+00 : f32
      %65 = vector.broadcast %cst_29 : f32 to vector<8x1xf32>
      %c0_30 = arith.constant 0 : index
      %c0_31 = arith.constant 0 : index
      %66 = vector.load %arg9[%c0_30, %c0_31] : memref<8x1xf32, #tpu.memory_space<vmem>>, vector<8x1xf32>
      tpu.vector_store %arg9[%c0_30, %c0_31], %65 {strides = array<i32>} : memref<8x1xf32, #tpu.memory_space<vmem>>, vector<8x1xf32>,
    } else {
    }
    %c0_23 = arith.constant 0 : index
    %c0_24 = arith.constant 0 : index
    %59 = vector.load %arg9[%c0_23, %c0_24] : memref<8x1xf32, #tpu.memory_space<vmem>>, vector<8x1xf32>
    %60 = arith.addf %59, %55 : vector<8x1xf32>
    %c0_25 = arith.constant 0 : index
    %c0_26 = arith.constant 0 : index
    %61 = vector.load %arg9[%c0_25, %c0_26] : memref<8x1xf32, #tpu.memory_space<vmem>>, vector<8x1xf32>
    tpu.vector_store %arg9[%c0_25, %c0_26], %60 {strides = array<i32>} : memref<8x1xf32, #tpu.memory_space<vmem>>, vector<8x1xf32>,
    %c0_i32_27 = arith.constant 0 : i32
    %62 = arith.cmpi eq, %arg1, %c0_i32_27 : i32
    %63 = arith.extui %62 : i1 to i32
    %c0_i32_28 = arith.constant 0 : i32
    %64 = arith.cmpi ne, %63, %c0_i32_28 : i32
    scf.if %64 {
      %c0_29 = arith.constant 0 : index
      %c0_30 = arith.constant 0 : index
      %65 = vector.load %arg9[%c0_29, %c0_30] : memref<8x1xf32, #tpu.memory_space<vmem>>, vector<8x1xf32>
      %66 = vector.shape_cast %65 : vector<8x1xf32> to vector<1x8x1xf32>
      %cst_31 = arith.constant dense<0.000000e+00> : vector<1xf32>
      %67 = vector.multi_reduction <add>, %66, %cst_31 [1, 2] : vector<1x8x1xf32> to vector<1xf32>
      %68 = vector.shape_cast %67 : vector<1xf32> to vector<1x1x1xf32>
      %69 = vector.extract %68[0, 0, 0] : f32 from vector<1x1x1xf32>
      %70 = vector.broadcast %69 : f32 to vector<1x1x128xf32>
      %c0_32 = arith.constant 0 : index
      %c0_33 = arith.constant 0 : index
      %c0_34 = arith.constant 0 : index
      %71 = vector.load %arg8[%c0_32, %c0_33, %c0_34] : memref<1x1x128xf32, #tpu.memory_space<vmem>>, vector<1x1x128xf32>
      tpu.vector_store %arg8[%c0_32, %c0_33, %c0_34], %70 {strides = array<i32>} : memref<1x1x128xf32, #tpu.memory_space<vmem>>, vector<1x1x128xf32>,
    } else {
    }
    return
  }
  func.func @transform_0(%arg0: i32, %arg1: i32) -> (i32, i32) {
    %c1_i32 = arith.constant 1 : i32
    %0 = arith.muli %arg0, %c1_i32 : i32
    %1 = arith.addi %0, %arg1 : i32
    %c0_i32 = arith.constant 0 : i32
    %2 = arith.minsi %1, %c0_i32 : i32
    %c0_i32_0 = arith.constant 0 : i32
    %c0_i32_1 = arith.constant 0 : i32
    return %2, %c0_i32_0 : i32, i32
  }
  func.func @transform_1(%arg0: i32, %arg1: i32) -> (i32, i32) {
    %c1_i32 = arith.constant 1 : i32
    %0 = arith.muli %arg0, %c1_i32 : i32
    %1 = arith.addi %0, %arg1 : i32
    %c0_i32 = arith.constant 0 : i32
    %2 = arith.minsi %1, %c0_i32 : i32
    %c0_i32_0 = arith.constant 0 : i32
    %c0_i32_1 = arith.constant 0 : i32
    return %2, %c0_i32_0 : i32, i32
  }
  func.func @transform_2(%arg0: i32, %arg1: i32) -> (i32, i32) {
    %c1_i32 = arith.constant 1 : i32
    %0 = arith.muli %arg0, %c1_i32 : i32
    %1 = arith.addi %0, %arg1 : i32
    %c0_i32 = arith.constant 0 : i32
    %2 = arith.minsi %1, %c0_i32 : i32
    %c0_i32_0 = arith.constant 0 : i32
    %c0_i32_1 = arith.constant 0 : i32
    return %2, %c0_i32_0 : i32, i32
  }
  func.func @transform_3(%arg0: i32, %arg1: i32) -> (i32, i32) {
    %c1_i32 = arith.constant 1 : i32
    %0 = arith.muli %arg0, %c1_i32 : i32
    %1 = arith.addi %0, %arg1 : i32
    %c0_i32 = arith.constant 0 : i32
    %2 = arith.minsi %1, %c0_i32 : i32
    %c0_i32_0 = arith.constant 0 : i32
    %c0_i32_1 = arith.constant 0 : i32
    return %2, %c0_i32_0 : i32, i32
  }
  func.func @transform_4(%arg0: i32, %arg1: i32) -> (i32, i32) {
    %c1_i32 = arith.constant 1 : i32
    %0 = arith.muli %arg0, %c1_i32 : i32
    %1 = arith.addi %0, %arg1 : i32
    %c0_i32 = arith.constant 0 : i32
    %2 = arith.minsi %1, %c0_i32 : i32
    %c0_i32_0 = arith.constant 0 : i32
    %c0_i32_1 = arith.constant 0 : i32
    return %2, %c0_i32_0 : i32, i32
  }
  func.func @transform_5(%arg0: i32, %arg1: i32) -> (i32, i32) {
    %c1_i32 = arith.constant 1 : i32
    %0 = arith.muli %arg0, %c1_i32 : i32
    %1 = arith.addi %0, %arg1 : i32
    %c0_i32 = arith.constant 0 : i32
    %2 = arith.minsi %1, %c0_i32 : i32
    %c0_i32_0 = arith.constant 0 : i32
    %c0_i32_1 = arith.constant 0 : i32
    return %2, %c0_i32_0 : i32, i32
  }
  func.func @transform_6(%arg0: i32, %arg1: i32) -> (i32, i32, i32) {
    %c0_i32 = arith.constant 0 : i32
    %c0_i32_0 = arith.constant 0 : i32
    %c0_i32_1 = arith.constant 0 : i32
    return %arg0, %c0_i32, %c0_i32_0 : i32, i32, i32
  }
}

</mosaic_0001>

<llo_original>
// kernel: tpu_custom_call.1
$region0: #{tpu_custom_call.1}
  #allocation0 [shape = 'u32[]', space=smem, size = 0x4, offset = 0x4, fixed_abs, tag = 'smem constant byte address 0x4 - core index']
  #allocation1 [shape = 'u32[144,128]{1,0:T(1,128)}', space=vmem, size = 0x12000, scoped, tag = 'internal scratch']
  #allocation2 [shape = 'f32[8,1]{1,0:T(8,128)}', space=vmem, size = 0x1000, scoped, tag = 'scratch operand']
  %s0 = inlined_call_operand.vmem [shape: f32[8,4], index: 0, kind: input, shape index: {}]
  %s1 = inlined_call_operand.vmem [shape: s32[8,1], index: 1, kind: input, shape index: {}]
  %s2 = inlined_call_operand.vmem [shape: f32[8,1], index: 2, kind: input, shape index: {}]
  %s3 = inlined_call_operand.vmem [shape: s32[8,1], index: 3, kind: input, shape index: {}]
  %s4 = inlined_call_operand.vmem [shape: f32[8,4], index: 4, kind: input, shape index: {}]
  %s5 = inlined_call_operand.vmem [shape: f32[8,4], index: 5, kind: input, shape index: {}]
  %s6 = inlined_call_operand.hbm [shape: f32[1,1,128], index: 6, kind: output, shape index: {}]
  %s7 = sld [smem:[#allocation0]]
  $region42: #{tpu_custom_call.1} parent=0
    _
  %s9 = ssub.s32 1, %s7
  %s10 = scalar_select 0, %s9, %s7
  $region1: #{tpu_custom_call.1} parent=0
    #allocation3 [shape = 'u8[512]{0}', space=vmem, size = 0x400, scoped, tag = 'output window, operand 0, single buffered']
    #allocation4 [shape = 's32[1]{0}', space=sflag, size = 0x4, scoped, tag = 'scoped memory for tpu_custom_call.1']
    %11 = vsyncpa [#allocation4], 0
    // Predicated region
    $region2: #{tpu_custom_call.1} parent=1 // pred_check
      _
    $region3: #{tpu_custom_call.1} parent=1 // pred_check_branch
      %13 = sbr.rel (0) target = $region5
    $region4: #{tpu_custom_call.1} parent=1 // pred_region
      %s14 = sadd.s32 0, 0
      %p15 = scmp.lt.s32.totalorder %s14, 0
      %s16 = scalar_select %p15, %s14, 0
      %p17 = scmp.lt.s32.totalorder %s16, 0
      %s18 = scalar_select %p17, %s16, 0
      %s19 = smul.addr %s18, 8
      %s20 = scalar_lea.vmem %s0, %s19
      %s21 = sadd.s32 0, 0
      %p22 = scmp.lt.s32.totalorder %s21, 0
      %s23 = scalar_select %p22, %s21, 0
    $region5: #{tpu_custom_call.1} parent=1 // pred_fallthru
      _
    // Predicated region
    $region6: #{tpu_custom_call.1} parent=1 // pred_check
      _
    $region7: #{tpu_custom_call.1} parent=1 // pred_check_branch
      %25 = sbr.rel (0) target = $region9
    $region8: #{tpu_custom_call.1} parent=1 // pred_region
      %s26 = sadd.s32 0, 0
      %p27 = scmp.lt.s32.totalorder %s26, 0
      %s28 = scalar_select %p27, %s26, 0
      %p29 = scmp.lt.s32.totalorder %s28, 0
      %s30 = scalar_select %p29, %s28, 0
      %s31 = smul.addr %s30, 8
      %s32 = scalar_lea.vmem %s1, %s31
      %s33 = sadd.s32 0, 0
      %p34 = scmp.lt.s32.totalorder %s33, 0
      %s35 = scalar_select %p34, %s33, 0
    $region9: #{tpu_custom_call.1} parent=1 // pred_fallthru
      _
    // Predicated region
    $region10: #{tpu_custom_call.1} parent=1 // pred_check
      _
    $region11: #{tpu_custom_call.1} parent=1 // pred_check_branch
      %37 = sbr.rel (0) target = $region13
    $region12: #{tpu_custom_call.1} parent=1 // pred_region
      %s38 = sadd.s32 0, 0
      %p39 = scmp.lt.s32.totalorder %s38, 0
      %s40 = scalar_select %p39, %s38, 0
      %p41 = scmp.lt.s32.totalorder %s40, 0
      %s42 = scalar_select %p41, %s40, 0
      %s43 = smul.addr %s42, 8
      %s44 = scalar_lea.vmem %s2, %s43
      %s45 = sadd.s32 0, 0
      %p46 = scmp.lt.s32.totalorder %s45, 0
      %s47 = scalar_select %p46, %s45, 0
    $region13: #{tpu_custom_call.1} parent=1 // pred_fallthru
      _
    // Predicated region
    $region14: #{tpu_custom_call.1} parent=1 // pred_check
      _
    $region15: #{tpu_custom_call.1} parent=1 // pred_check_branch
      %49 = sbr.rel (0) target = $region17
    $region16: #{tpu_custom_call.1} parent=1 // pred_region
      %s50 = sadd.s32 0, 0
      %p51 = scmp.lt.s32.totalorder %s50, 0
      %s52 = scalar_select %p51, %s50, 0
      %p53 = scmp.lt.s32.totalorder %s52, 0
      %s54 = scalar_select %p53, %s52, 0
      %s55 = smul.addr %s54, 8
      %s56 = scalar_lea.vmem %s3, %s55
      %s57 = sadd.s32 0, 0
      %p58 = scmp.lt.s32.totalorder %s57, 0
      %s59 = scalar_select %p58, %s57, 0
    $region17: #{tpu_custom_call.1} parent=1 // pred_fallthru
      _
    // Predicated region
    $region18: #{tpu_custom_call.1} parent=1 // pred_check
      _
    $region19: #{tpu_custom_call.1} parent=1 // pred_check_branch
      %61 = sbr.rel (0) target = $region21
    $region20: #{tpu_custom_call.1} parent=1 // pred_region
      %s62 = sadd.s32 0, 0
      %p63 = scmp.lt.s32.totalorder %s62, 0
      %s64 = scalar_select %p63, %s62, 0
      %p65 = scmp.lt.s32.totalorder %s64, 0
      %s66 = scalar_select %p65, %s64, 0
      %s67 = smul.addr %s66, 8
      %s68 = scalar_lea.vmem %s4, %s67
      %s69 = sadd.s32 0, 0
      %p70 = scmp.lt.s32.totalorder %s69, 0
      %s71 = scalar_select %p70, %s69, 0
    $region21: #{tpu_custom_call.1} parent=1 // pred_fallthru
      _
    // Predicated region
    $region22: #{tpu_custom_call.1} parent=1 // pred_check
      _
    $region23: #{tpu_custom_call.1} parent=1 // pred_check_branch
      %73 = sbr.rel (0) target = $region25
    $region24: #{tpu_custom_call.1} parent=1 // pred_region
      %s74 = sadd.s32 0, 0
      %p75 = scmp.lt.s32.totalorder %s74, 0
      %s76 = scalar_select %p75, %s74, 0
      %p77 = scmp.lt.s32.totalorder %s76, 0
      %s78 = scalar_select %p77, %s76, 0
      %s79 = smul.addr %s78, 8
      %s80 = scalar_lea.vmem %s5, %s79
      %s81 = sadd.s32 0, 0
      %p82 = scmp.lt.s32.totalorder %s81, 0
      %s83 = scalar_select %p82, %s81, 0
    $region25: #{tpu_custom_call.1} parent=1 // pred_fallthru
      _
    %s84 = sadd.s32 0, 0
    %p85 = scmp.lt.s32.totalorder %s84, 0
    %s86 = scalar_select %p85, %s84, 0
    %p87 = scmp.lt.s32.totalorder %s86, 0
    %s88 = scalar_select %p87, %s86, 0
    %s89 = smul.addr %s88, 8
    %s90 = scalar_lea.vmem %s0, %s89
    %s91 = sadd.s32 0, 0
    %p92 = scmp.lt.s32.totalorder %s91, 0
    %s93 = scalar_select %p92, %s91, 0
    %p94 = scmp.lt.s32.totalorder %s93, 0
    %s95 = scalar_select %p94, %s93, 0
    %s96 = smul.addr %s95, 8
    %s97 = scalar_lea.vmem %s1, %s96
    %s98 = sadd.s32 0, 0
    %p99 = scmp.lt.s32.totalorder %s98, 0
    %s100 = scalar_select %p99, %s98, 0
    %p101 = scmp.lt.s32.totalorder %s100, 0
    %s102 = scalar_select %p101, %s100, 0
    %s103 = smul.addr %s102, 8
    %s104 = scalar_lea.vmem %s2, %s103
    %s105 = sadd.s32 0, 0
    %p106 = scmp.lt.s32.totalorder %s105, 0
    %s107 = scalar_select %p106, %s105, 0
    %p108 = scmp.lt.s32.totalorder %s107, 0
    %s109 = scalar_select %p108, %s107, 0
    %s110 = smul.addr %s109, 8
    %s111 = scalar_lea.vmem %s3, %s110
    %s112 = sadd.s32 0, 0
    %p113 = scmp.lt.s32.totalorder %s112, 0
    %s114 = scalar_select %p113, %s112, 0
    %p115 = scmp.lt.s32.totalorder %s114, 0
    %s116 = scalar_select %p115, %s114, 0
    %s117 = smul.addr %s116, 8
    %s118 = scalar_lea.vmem %s4, %s117
    %s119 = sadd.s32 0, 0
    %p120 = scmp.lt.s32.totalorder %s119, 0
    %s121 = scalar_select %p120, %s119, 0
    %p122 = scmp.lt.s32.totalorder %s121, 0
    %s123 = scalar_select %p122, %s121, 0
    %s124 = smul.addr %s123, 8
    %s125 = scalar_lea.vmem %s5, %s124
    %s126 = sadd.s32 0, 0
    %p127 = scmp.lt.s32.totalorder %s126, 0
    %s128 = scalar_select %p127, %s126, 0
    %p129 = scmp.lt.s32.totalorder %s128, 0
    %s130 = scalar_select %p129, %s128, 0
    %s131 = smul.addr %s130, 8
    %s132 = scalar_lea.vmem %s0, %s131
    %s133 = sadd.s32 0, 0
    %p134 = scmp.lt.s32.totalorder %s133, 0
    %s135 = scalar_select %p134, %s133, 0
    %s136 = sadd.s32 0, 0
    %p137 = scmp.lt.s32.totalorder %s136, 0
    %s138 = scalar_select %p137, %s136, 0
    %p139 = scmp.lt.s32.totalorder %s138, 0
    %s140 = scalar_select %p139, %s138, 0
    %s141 = smul.addr %s140, 8
    %s142 = scalar_lea.vmem %s1, %s141
    %s143 = sadd.s32 0, 0
    %p144 = scmp.lt.s32.totalorder %s143, 0
    %s145 = scalar_select %p144, %s143, 0
    %s146 = sadd.s32 0, 0
    %p147 = scmp.lt.s32.totalorder %s146, 0
    %s148 = scalar_select %p147, %s146, 0
    %p149 = scmp.lt.s32.totalorder %s148, 0
    %s150 = scalar_select %p149, %s148, 0
    %s151 = smul.addr %s150, 8
    %s152 = scalar_lea.vmem %s2, %s151
    %s153 = sadd.s32 0, 0
    %p154 = scmp.lt.s32.totalorder %s153, 0
    %s155 = scalar_select %p154, %s153, 0
    %s156 = sadd.s32 0, 0
    %p157 = scmp.lt.s32.totalorder %s156, 0
    %s158 = scalar_select %p157, %s156, 0
    %p159 = scmp.lt.s32.totalorder %s158, 0
    %s160 = scalar_select %p159, %s158, 0
    %s161 = smul.addr %s160, 8
    %s162 = scalar_lea.vmem %s3, %s161
    %s163 = sadd.s32 0, 0
    %p164 = scmp.lt.s32.totalorder %s163, 0
    %s165 = scalar_select %p164, %s163, 0
    %s166 = sadd.s32 0, 0
    %p167 = scmp.lt.s32.totalorder %s166, 0
    %s168 = scalar_select %p167, %s166, 0
    %p169 = scmp.lt.s32.totalorder %s168, 0
    %s170 = scalar_select %p169, %s168, 0
    %s171 = smul.addr %s170, 8
    %s172 = scalar_lea.vmem %s4, %s171
    %s173 = sadd.s32 0, 0
    %p174 = scmp.lt.s32.totalorder %s173, 0
    %s175 = scalar_select %p174, %s173, 0
    %s176 = sadd.s32 0, 0
    %p177 = scmp.lt.s32.totalorder %s176, 0
    %s178 = scalar_select %p177, %s176, 0
    %p179 = scmp.lt.s32.totalorder %s178, 0
    %s180 = scalar_select %p179, %s178, 0
    %s181 = smul.addr %s180, 8
    %s182 = scalar_lea.vmem %s5, %s181
    %s183 = sadd.s32 0, 0
    %p184 = scmp.lt.s32.totalorder %s183, 0
    %s185 = scalar_select %p184, %s183, 0
    %s186 = sadd.s32 0, 0
    %v187 = vld [vmem:[%s132] sm:$0xff]
    %v188 = vld [vmem:[%s142] sm:$0xff]
    %v189 = vld [vmem:[%s152] sm:$0xff]
    %v190 = vld [vmem:[%s162] sm:$0xff]
    %v191 = vcvt.s32.f32 %v190
    %v192 = vld [vmem:[%s172] sm:$0xff]
    %v193 = vld [vmem:[%s182] sm:$0xff]
    %s194 = smul.u32 %s186, 8
    %v195 = vlaneseq
    %v196 = vshrl.u32 %v195, 7
    %v197 = vstv %s194
    %v198 = vadd.s32 %v197, %v196
    %vm199 = vcmp.lt.s32.totalorder %v198, 8
    %vm200 = vcmask 31744
    %v201 = vsel %vm200, %v187, -inf
    %202 = vmax.xlane.f32.xlu0 %v201
    %v203 = vpop.xlane.xlu0 %202
    %v204 = vsub.f32 %v187, %v203
    %v205 = vmul.f32 %v204, 1.442695
    %v206 = vpow.pop %v205
    %v207 = vsel %vm200, %v206, 0.0
    %208 = vadd.xlane.f32.xlu0 %v207
    %v209 = vpop.xlane.xlu0 %208
    %v210 = vlog2.pop %v209
    %v211 = vmul.f32 %v210, 0.6931472
    %v212 = vadd.f32 %v203, %v211
    %v213 = vlaneseq
    %v214 = vand.u32 %v213, 127
    %215 = vset.pattern.permute.xlu0 0
    %216 = vperm.xlu0 %215, %v188
    %v217 = vpop.permute.xlu0 %216
    %vm218 = vcmp.eq.s32.totalorder %v214, %v217
    %v219 = vsel %vm218, %v187, 0.0
    %v220 = vsel %vm200, %v219, 0.0
    %221 = vadd.xlane.f32.xlu0 %v220
    %v222 = vpop.xlane.xlu0 %221
    %v223 = vsub.f32 %v212, %v222
    %v224 = vmax.f32 %v189, 0.0
    %v225 = vmul.f32 %v189, %v191
    %v226 = vsub.f32 %v224, %v225
    %v227 = vand.u32 2147483647, %v189
    %v228 = vsub.f32 0.0, %v227
    %v229 = vmul.f32 %v228, 1.442695
    %v230 = vpow.pop %v229
    %v231 = vadd.f32 %v230, 1.0
    %v232 = vlog2.pop %v231
    %v233 = vmul.f32 %v232, 0.6931472
    %v234 = vadd.f32 %v226, %v233
    %v235 = vsub.f32 %v192, %v193
    %v236 = vmul.f32 %v235, %v235
    %v237 = vsel %vm200, %v236, 0.0
    %238 = vadd.xlane.f32.xlu0 %v237
    %v239 = vpop.xlane.xlu0 %238
    %v240 = vadd.f32 %v223, %v234
    %v241 = vmul.f32 %v240, 0.125
    %v242 = vmul.f32 %v239, 0.03125
    %v243 = vadd.f32 %v241, %v242
    %v244 = vsel %vm199, %v243, 0.0
    %p245 = scmp.eq.s32.totalorder 0, 0
    // Predicated region
    $region26: #{tpu_custom_call.1} parent=1 // pred_check
      %p246 = pneg %p245
    $region27: #{tpu_custom_call.1} parent=1 // pred_check_branch
      %248 = sbr.rel (%p246) target = $region29
    $region28: #{tpu_custom_call.1} parent=1 // pred_region
      %vm249 = vcmask 7168
      %250 = vst.msk [vmem:[#allocation2] sm:$0xff] %vm249, 0.0
    $region29: #{tpu_custom_call.1} parent=1 // pred_fallthru
      _
    %v251 = vld [vmem:[#allocation2] sm:$0xff]
    %v252 = vadd.f32 %v251, %v244
    %vm253 = vcmask 7168
    %254 = vst.msk [vmem:[#allocation2] sm:$0xff] %vm253, %v252
    // Predicated region
    $region30: #{tpu_custom_call.1} parent=1 // pred_check
      %p255 = pneg %p245
    $region31: #{tpu_custom_call.1} parent=1 // pred_check_branch
      %257 = sbr.rel (%p255) target = $region33
    $region32: #{tpu_custom_call.1} parent=1 // pred_region
      %v258 = vld [vmem:[#allocation2] sm:$0xff]
      %v259 = vsel %vm253, %v258, 0.0
      %260 = vadd.xlane.f32.xlu0 %v259
      %v261 = vpop.xlane.xlu0 %260
      %v262 = vrot.slane %v261, 4
      %v263 = vadd.f32 %v261, %v262
      %v264 = vrot.slane %v263, 2
      %v265 = vadd.f32 %v263, %v264
      %v266 = vrot.slane %v265, 1
      %v267 = vadd.f32 %v265, %v266
      %s268 = vtos %v267
      %v269 = vstv %s268
      %270 = vst [vmem:[#allocation3] sm:$0x1] %v269
    $region33: #{tpu_custom_call.1} parent=1 // pred_fallthru
      _
    // Predicated region
    $region34: #{tpu_custom_call.1} parent=1 // pred_check
      _
    $region35: #{tpu_custom_call.1} parent=1 // pred_check_branch
      %272 = sbr.rel (0) target = $region37
    $region36: #{tpu_custom_call.1} parent=1 // pred_region
      %s274 = ssub.s32 16, 16
      %275 = vsyncadd [#allocation4], %s274
      %s277 = sshll.u32 [#allocation3], 4
      %s278 = int_to_ptr.vmem [resolvable:$true] %s277
      %280 = dma.vmem_to_hbm [thread:$0]  %s278, 16, %s6, [#allocation4]
    $region37: #{tpu_custom_call.1} parent=1 // pred_fallthru
      _
    // Predicated region
    $region38: #{tpu_custom_call.1} parent=1 // pred_check
      _
    $region39: #{tpu_custom_call.1} parent=1 // pred_check_branch
      %282 = sbr.rel (0) target = $region41
    $region40: #{tpu_custom_call.1} parent=1 // pred_region
      %283 = dma.done [#allocation4], 16
    $region41: #{tpu_custom_call.1} parent=1 // pred_fallthru
      _
    %284 = vsyncpa [#allocation4], 1

</llo_original>
